<compile_context>
chip_gen: v7x
topology: tpu7x:2x2x1
jax: 0.10.0
libtpu: 0.0.40
codegen_flags: <defaults>
</compile_context>

<pallas_src>
import jax
import jax.numpy as jnp
from jax.experimental import pallas as pl
from jax.experimental.pallas import tpu as pltpu


# ------------------------- fixed problem geometry -------------------------- #

def _ceil8(n):
    return (n + 7) // 8 * 8

INPUT_DIM = 1              # input_dim - 1 in the module
ENC_HID = 8                # encoder_hidden_dim
HID = 64                   # hidden_dim
IO = INPUT_DIM + ENC_HID   # 9  (input_output_dim)
IO2 = 2 * IO               # 18 (fused s|t width)
IO2P = _ceil8(IO2)         # 24 (sublane-aligned)
BIG_ROWS = 3 * IO2P        # 72: [ z | q_pre | k_pre ] rows of the fused matmul

# row offsets inside the consolidated weight slab (all sublane-aligned)
W_WFOLD0 = 0                       # (64, 64)  encoder.fc2 ∘ nn.fc1 fold
W_BIG0 = W_WFOLD0 + HID            # (72, 64)  z / q_pre / k_pre fused matmul
W_WN0 = W_BIG0 + BIG_ROWS          # (18, 18)  block-diag s|t nnout
W_WO0 = _ceil8(W_WN0 + IO2)        # (2, 18)   block-diag s|t output_linear
W_ROWS = _ceil8(W_WO0 + 2)         # 168

# lane indices inside the consolidated column slab (72, 8)
C_EW1, C_EB1, C_NW1X, C_BFOLD, C_BBIG, C_BN, C_BO = range(7)
COLS_SHAPE = (BIG_ROWS, 8)


# ----------------------------- Pallas kernel ------------------------------- #

def _sigmoid(v):
    # tanh form keeps the transcendental on the EUP slot (no VALU divide).
    return 0.5 * (jnp.tanh(0.5 * v) + 1.0)


def invertible_nn_kernel(x_ref, w_ref, c_ref, out_ref):
    f32 = jnp.float32
    wdt = w_ref.dtype          # f32, or bf16 if packed for v6e/v7x

    x1 = x_ref[0:1, :]         # first half of chunk(2, dim=1)   -> (1, B)
    x2 = x_ref[1:2, :]         # second half                     -> (1, B)

    # column parameters (kept f32; lane-broadcast over the batch)
    ew1 = c_ref[0:HID, C_EW1:C_EW1 + 1]
    eb1 = c_ref[0:HID, C_EB1:C_EB1 + 1]
    nw1x = c_ref[0:HID, C_NW1X:C_NW1X + 1]
    bfold = c_ref[0:HID, C_BFOLD:C_BFOLD + 1]
    b_big = c_ref[0:BIG_ROWS, C_BBIG:C_BBIG + 1]
    bn = c_ref[0:IO2, C_BN:C_BN + 1]
    bo = c_ref[0:2, C_BO:C_BO + 1]

    # weight slab slices (all sublane-aligned starts)
    wfold_T = w_ref[W_WFOLD0:W_WFOLD0 + HID, :]          # (64, 64)
    w_big = w_ref[W_BIG0:W_BIG0 + BIG_ROWS, :]           # (72, 64)
    wn_T = w_ref[W_WN0:W_WN0 + IO2, 0:IO2]               # (18, 18)
    wo_T = w_ref[W_WO0:W_WO0 + 2, 0:IO2]                 # (2, 18)

    # encoder.fc1 (K=1 -> outer-product broadcast), feature-major  (64, B)
    h = jnp.maximum(ew1 * x1 + eb1, 0.0)

    # encoder.fc2 folded into nn.fc1 (exact: no nonlinearity in between)
    h2 = jnp.maximum(
        nw1x * x1
        + jnp.dot(wfold_T, h.astype(wdt), preferred_element_type=f32)
        + bfold, 0.0)                                    # (64, B)

    # one fused matmul: rows 0:18 -> z (=[nn_out|nn_out]), 24:42 -> q_pre,
    # 48:66 -> k_pre (nn.fc2 folded into q/k; s|t fused block-diagonally)
    big = jnp.dot(w_big, h2.astype(wdt), preferred_element_type=f32) + b_big
    z = big[0:IO2, :]                                    # (18, B)
    q = jnp.maximum(big[IO2P:IO2P + IO2, :], 0.0)
    k = jnp.maximum(big[2 * IO2P:2 * IO2P + IO2, :], 0.0)

    aw = _sigmoid(q + k)
    o = aw * z
    aw2 = _sigmoid(jnp.maximum(
        jnp.dot(wn_T, o.astype(wdt), preferred_element_type=f32) + bn, 0.0))
    f2 = z + aw2 * o                                     # (18, B)

    # block-diag output projection: row 0 = s_out, row 1 = t_out
    st = jnp.dot(wo_T, f2.astype(wdt), preferred_element_type=f32) + bo
    y2 = x2 * jnp.exp(st[0:1, :]) + st[1:2, :]           # (1, B), f32

    # single lane-dense full-block store: row 0 = x1, row 1 = y2
    out_ref[...] = jnp.concatenate([x1, y2], axis=0)


# ------------------------------ wrapper ------------------------------------ #

def _pick_batch_tile(b):
    # Small batches: one grid step (the ~0.35us/step pipeline overhead would
    # dominate).  Large batches: >=1024-row lane tiles (multiples of 128) so a
    # multi-step "parallel" grid can feed both v7x TensorCores.
    if b >= 2048:
        for cand in (4096, 2048, 1024):
            if b % cand == 0 and cand < b:
                return cand
    return b


def invertible_nn_forward(x, packed, *, batch_tile=None):
    w_all, cols = packed
    b = int(x.shape[0])

    if batch_tile is None:
        tb = _pick_batch_tile(b)
    else:
        if b % batch_tile != 0 or (batch_tile != b and batch_tile % 128 != 0):
            raise ValueError(
                f"batch_tile={batch_tile} must divide batch={b} and be a "
                f"multiple of 128 (or equal the batch).")
        tb = batch_tile
    grid = (b // tb,)

    x_t = x.T                    # (2, B): batch on lanes (feature-major)

    matmul_flops = 2 * b * (HID * HID + BIG_ROWS * HID + IO2 * IO2 + 2 * IO2)
    cost = pl.CostEstimate(
        flops=int(matmul_flops + 60 * b),
        transcendentals=int(b * (2 * IO2 + 1)),
        bytes_accessed=int(4 * 4 * b
                           + int(w_all.size) * w_all.dtype.itemsize
                           + 4 * int(cols.size)))

    out_t = pl.pallas_call(
        invertible_nn_kernel,
        grid=grid,
        in_specs=[
            pl.BlockSpec((2, tb), lambda i: (0, i)),
            pl.BlockSpec(w_all.shape, lambda i: (0, 0)),
            pl.BlockSpec(cols.shape, lambda i: (0, 0)),
        ],
        out_specs=pl.BlockSpec((2, tb), lambda i: (0, i)),
        out_shape=jax.ShapeDtypeStruct((2, b), jnp.float32),
        compiler_params=pltpu.CompilerParams(
            dimension_semantics=("parallel",),
            vmem_limit_bytes=32 * 1024 * 1024),
        cost_estimate=cost,
    )(x_t, w_all, cols)
    return out_t.T               # back to (B, 2)


# ----------------------------- plain-JAX glue ------------------------------- #

def init_linear(key, fan_in, fan_out):
    """Torch nn.Linear-style init; weight stored (in, out), bias (1, out)."""
    kw, kb = jax.random.split(key)
    bound = 1.0 / (fan_in ** 0.5)
    w = jax.random.uniform(kw, (fan_in, fan_out), jnp.float32, -bound, bound)
    b = jax.random.uniform(kb, (1, fan_out), jnp.float32, -bound, bound)
    return w, b


def make_raw_params(key, input_dim_total, hidden_dim, encoder_hidden_dim):
    input_dim = input_dim_total - 1                  # as in the module
    io_dim = input_dim + encoder_hidden_dim          # input_output_dim
    keys = jax.random.split(key, 12)

    ew1, eb1 = init_linear(keys[0], input_dim, hidden_dim)           # (1, 64)
    ew2, eb2 = init_linear(keys[1], hidden_dim, encoder_hidden_dim)  # (64, 8)
    nw1, nb1 = init_linear(keys[2], io_dim, hidden_dim)              # (9, 64)
    nw2, nb2 = init_linear(keys[3], hidden_dim, io_dim)              # (64, 9)

    def attn(k0, k1, k2, k3):
        wq, bq = init_linear(k0, io_dim, io_dim)
        wk, bk = init_linear(k1, io_dim, io_dim)
        wn, bn = init_linear(k2, io_dim, io_dim)
        wo, bo = init_linear(k3, io_dim, input_dim)                  # (9, 1)
        return dict(wq=wq, bq=bq, wk=wk, bk=bk, wn=wn, bn=bn, wo=wo, bo=bo)

    s = attn(keys[4], keys[5], keys[6], keys[7])
    t = attn(keys[8], keys[9], keys[10], keys[11])
    return dict(ew1=ew1, eb1=eb1, ew2=ew2, eb2=eb2,
                nw1=nw1, nb1=nb1, nw2=nw2, nb2=nb2, s=s, t=t)


def pack_params(p, input_dim, encoder_hidden_dim, *, matmul_dtype=jnp.float32):
    """Pack parameters into two feature-major slabs: (168,64) and (72,8)."""
    io = input_dim + encoder_hidden_dim
    assert io == IO and p['nw1'].shape == (io, HID) and p['nw2'].shape == (HID, io)
    f32 = jnp.float32

    nw1x = p['nw1'][:input_dim, :]               # (1, 64)  x1 rows of nn.fc1
    nw1e = p['nw1'][input_dim:, :]               # (8, 64)  encoded rows

    # exact fold of encoder.fc2 into nn.fc1 (no nonlinearity between them)
    w_fold = p['ew2'] @ nw1e                     # (64, 64)
    b_fold = p['eb2'] @ nw1e + p['nb1']          # (1, 64)
    wfold_T = w_fold.T                           # feature-major (out, in)

    # nn.fc2, duplicated for the fused s|t branches, feature-major
    nw2_T = p['nw2'].T                                            # (9, 64)
    nb2_c = p['nb2'].T                                            # (9, 1)
    nw2d_T = jnp.concatenate([nw2_T, nw2_T], axis=0)              # (18, 64)
    nb2d_c = jnp.concatenate([nb2_c, nb2_c], axis=0)              # (18, 1)

    def bd_T(a_w, b_w):          # block-diag of (out,in)-transposed weights
        z9 = jnp.zeros((io, io), f32)
        return jnp.block([[a_w.T, z9], [z9, b_w.T]])              # (18, 18)

    wq_T = bd_T(p['s']['wq'], p['t']['wq'])
    wk_T = bd_T(p['s']['wk'], p['t']['wk'])
    wn_T = bd_T(p['s']['wn'], p['t']['wn'])

    bq_c = jnp.concatenate([p['s']['bq'], p['t']['bq']], axis=1).T  # (18, 1)
    bk_c = jnp.concatenate([p['s']['bk'], p['t']['bk']], axis=1).T
    bn_c = jnp.concatenate([p['s']['bn'], p['t']['bn']], axis=1).T

    # fold nn.fc2 into the q/k projections (exact: both linear):
    #   q_pre = Wq @ (nw2d @ h2 + nb2) + bq = (Wq @ nw2d) @ h2 + (Wq @ nb2 + bq)
    wq_fold = wq_T @ nw2d_T                      # (18, 64)
    bq_fold = wq_T @ nb2d_c + bq_c               # (18, 1)
    wk_fold = wk_T @ nw2d_T
    bk_fold = wk_T @ nb2d_c + bk_c

    pad_w = jnp.zeros((IO2P - IO2, HID), f32)
    pad_b = jnp.zeros((IO2P - IO2, 1), f32)
    w_big = jnp.concatenate([nw2d_T, pad_w, wq_fold, pad_w, wk_fold, pad_w],
                            axis=0)                               # (72, 64)
    b_big = jnp.concatenate([nb2d_c, pad_b, bq_fold, pad_b, bk_fold, pad_b],
                            axis=0)                               # (72, 1)

    # block-diag output projection: row 0 -> s_out, row 1 -> t_out
    wo_T = jnp.zeros((2, IO2), f32)
    wo_T = wo_T.at[0:1, :io].set(p['s']['wo'].T)
    wo_T = wo_T.at[1:2, io:].set(p['t']['wo'].T)                  # (2, 18)
    bo_c = jnp.concatenate([p['s']['bo'], p['t']['bo']], axis=1).T  # (2, 1)

    # consolidated weight slab (one DMA)
    w_all = jnp.zeros((W_ROWS, HID), f32)
    w_all = w_all.at[W_WFOLD0:W_WFOLD0 + HID, :].set(wfold_T)
    w_all = w_all.at[W_BIG0:W_BIG0 + BIG_ROWS, :].set(w_big)
    w_all = w_all.at[W_WN0:W_WN0 + IO2, 0:IO2].set(wn_T)
    w_all = w_all.at[W_WO0:W_WO0 + 2, 0:IO2].set(wo_T)
    w_all = w_all.astype(matmul_dtype)   # bf16 option for v6e/v7x

    # consolidated bias/column slab (one DMA); kept f32
    cols = jnp.zeros(COLS_SHAPE, f32)
    cols = cols.at[0:HID, C_EW1].set(p['ew1'][0])     # encoder.fc1 weight col
    cols = cols.at[0:HID, C_EB1].set(p['eb1'][0])     # encoder.fc1 bias
    cols = cols.at[0:HID, C_NW1X].set(nw1x[0])        # nn.fc1 rows for x1
    cols = cols.at[0:HID, C_BFOLD].set(b_fold[0])     # eb2 @ nw1e + nb1
    cols = cols.at[0:BIG_ROWS, C_BBIG].set(b_big[:, 0])
    cols = cols.at[0:IO2, C_BN].set(bn_c[:, 0])
    cols = cols.at[0:2, C_BO].set(bo_c[:, 0])

    return (w_all, cols)


def reference_forward(x, p, input_dim):
    x1, x2 = x[:, :input_dim], x[:, input_dim:]
    h = jax.nn.relu(x1 @ p['ew1'] + p['eb1'])
    encoded = h @ p['ew2'] + p['eb2']
    z_in = jnp.concatenate([x1, encoded], axis=-1)
    h2 = jax.nn.relu(z_in @ p['nw1'] + p['nb1'])
    nn_out = h2 @ p['nw2'] + p['nb2']

    def attn(z, a):
        q = jax.nn.relu(z @ a['wq'] + a['bq'])
        k = jax.nn.relu(z @ a['wk'] + a['bk'])
        aw = jax.nn.sigmoid(q + k)
        out = aw * z
        aw2 = jax.nn.sigmoid(jax.nn.relu(out @ a['wn'] + a['bn']))
        f2 = z + aw2 * out
        return f2 @ a['wo'] + a['bo']

    s_out = attn(nn_out, p['s'])
    t_out = attn(nn_out, p['t'])
    y2 = x2 * jnp.exp(s_out) + t_out
    return jnp.concatenate([x1, y2], axis=1)


if __name__ == "__main__":
    key = jax.random.PRNGKey(0)
    k_x, k_p = jax.random.split(key)

    batch = 64
    input_dim_total = 2       # VdP states; chunk -> (B,1), (B,1)
    hidden_dim = 64
    encoder_hidden_dim = 8

    x = jax.random.normal(k_x, (batch, input_dim_total), jnp.float32)
    raw = make_raw_params(k_p, input_dim_total, hidden_dim, encoder_hidden_dim)
    packed = pack_params(raw, input_dim_total - 1, encoder_hidden_dim)

    out = invertible_nn_forward(x, packed)     # single grid step at B=64
    out = jax.block_until_ready(out)

    ref = reference_forward(x, raw, input_dim_total - 1)
    assert out.shape == (batch, input_dim_total), out.shape
    assert jnp.allclose(out, ref, atol=1e-4, rtol=1e-4), \
        float(jnp.abs(out - ref).max())
    print("KERNEL_OK")
</pallas_src>

<mosaic_0001>
module attributes {stable_mosaic.version = 11 : i64} {
  func.func @invertible_nn_kernel(%arg0: i32, %arg1: memref<2x64xf32, #tpu.memory_space<vmem>>, %arg2: memref<168x64xf32, #tpu.memory_space<vmem>>, %arg3: memref<72x8xf32, #tpu.memory_space<vmem>>, %arg4: memref<2x64xf32, #tpu.memory_space<vmem>>) attributes {dimension_semantics = [#tpu.dimension_semantics<parallel>], iteration_bounds = array<i64: 1>, scalar_prefetch = 0 : i64, scratch_operands = 0 : i64, tpu.core_type = #tpu.core_type<tc>, window_params = [{transform_indices = @transform_0, window_bounds = array<i64: 2, 64>}, {pipeline_mode = #tpu.pipeline_mode<synchronous>, transform_indices = @transform_1, window_bounds = array<i64: 168, 64>}, {pipeline_mode = #tpu.pipeline_mode<synchronous>, transform_indices = @transform_2, window_bounds = array<i64: 72, 8>}, {transform_indices = @transform_3, window_bounds = array<i64: 2, 64>}]} {
    %c0 = arith.constant 0 : index
    %c0_0 = arith.constant 0 : index
    %0 = vector.load %arg1[%c0, %c0_0] : memref<2x64xf32, #tpu.memory_space<vmem>>, vector<1x64xf32>
    %c1 = arith.constant 1 : index
    %c0_1 = arith.constant 0 : index
    %1 = vector.load %arg1[%c1, %c0_1] : memref<2x64xf32, #tpu.memory_space<vmem>>, vector<1x64xf32>
    %c0_2 = arith.constant 0 : index
    %c0_3 = arith.constant 0 : index
    %2 = vector.load %arg3[%c0_2, %c0_3] : memref<72x8xf32, #tpu.memory_space<vmem>>, vector<64x1xf32>
    %c0_4 = arith.constant 0 : index
    %c1_5 = arith.constant 1 : index
    %3 = vector.load %arg3[%c0_4, %c1_5] : memref<72x8xf32, #tpu.memory_space<vmem>>, vector<64x1xf32>
    %c0_6 = arith.constant 0 : index
    %c2 = arith.constant 2 : index
    %4 = vector.load %arg3[%c0_6, %c2] : memref<72x8xf32, #tpu.memory_space<vmem>>, vector<64x1xf32>
    %c0_7 = arith.constant 0 : index
    %c3 = arith.constant 3 : index
    %5 = vector.load %arg3[%c0_7, %c3] : memref<72x8xf32, #tpu.memory_space<vmem>>, vector<64x1xf32>
    %c0_8 = arith.constant 0 : index
    %c4 = arith.constant 4 : index
    %6 = vector.load %arg3[%c0_8, %c4] : memref<72x8xf32, #tpu.memory_space<vmem>>, vector<72x1xf32>
    %c0_9 = arith.constant 0 : index
    %c5 = arith.constant 5 : index
    %7 = vector.load %arg3[%c0_9, %c5] : memref<72x8xf32, #tpu.memory_space<vmem>>, vector<18x1xf32>
    %c0_10 = arith.constant 0 : index
    %c6 = arith.constant 6 : index
    %8 = vector.load %arg3[%c0_10, %c6] : memref<72x8xf32, #tpu.memory_space<vmem>>, vector<2x1xf32>
    %c0_11 = arith.constant 0 : index
    %c0_12 = arith.constant 0 : index
    %9 = vector.load %arg2[%c0_11, %c0_12] : memref<168x64xf32, #tpu.memory_space<vmem>>, vector<64x64xf32>
    %c64 = arith.constant 64 : index
    %c0_13 = arith.constant 0 : index
    %10 = vector.load %arg2[%c64, %c0_13] : memref<168x64xf32, #tpu.memory_space<vmem>>, vector<72x64xf32>
    %c136 = arith.constant 136 : index
    %c0_14 = arith.constant 0 : index
    %11 = vector.load %arg2[%c136, %c0_14] : memref<168x64xf32, #tpu.memory_space<vmem>>, vector<18x18xf32>
    %c160 = arith.constant 160 : index
    %c0_15 = arith.constant 0 : index
    %12 = vector.load %arg2[%c160, %c0_15] : memref<168x64xf32, #tpu.memory_space<vmem>>, vector<2x18xf32>
    %13 = vector.broadcast %2 : vector<64x1xf32> to vector<64x64xf32>
    %14 = vector.broadcast %0 : vector<1x64xf32> to vector<64x64xf32>
    %15 = arith.mulf %13, %14 : vector<64x64xf32>
    %16 = vector.broadcast %3 : vector<64x1xf32> to vector<64x64xf32>
    %17 = arith.addf %15, %16 : vector<64x64xf32>
    %cst = arith.constant 0.000000e+00 : f32
    %18 = vector.broadcast %cst : f32 to vector<64x64xf32>
    %19 = arith.maximumf %17, %18 : vector<64x64xf32>
    %20 = vector.broadcast %4 : vector<64x1xf32> to vector<64x64xf32>
    %21 = vector.broadcast %0 : vector<1x64xf32> to vector<64x64xf32>
    %22 = arith.mulf %20, %21 : vector<64x64xf32>
    %cst_16 = arith.constant dense<0.000000e+00> : vector<64x64xf32>
    %23 = tpu.matmul %9, %19, %cst_16 {dimension_numbers = #tpu.dot_dimension_numbers<[1], [0], [0], [1], [0, 0, 1, 1], [], []>} : vector<64x64xf32>, vector<64x64xf32>, vector<64x64xf32> -> vector<64x64xf32>
    %24 = arith.addf %22, %23 : vector<64x64xf32>
    %25 = vector.broadcast %5 : vector<64x1xf32> to vector<64x64xf32>
    %26 = arith.addf %24, %25 : vector<64x64xf32>
    %cst_17 = arith.constant 0.000000e+00 : f32
    %27 = vector.broadcast %cst_17 : f32 to vector<64x64xf32>
    %28 = arith.maximumf %26, %27 : vector<64x64xf32>
    %cst_18 = arith.constant dense<0.000000e+00> : vector<72x64xf32>
    %29 = tpu.matmul %10, %28, %cst_18 {dimension_numbers = #tpu.dot_dimension_numbers<[1], [0], [0], [1], [0, 0, 1, 1], [], []>} : vector<72x64xf32>, vector<64x64xf32>, vector<72x64xf32> -> vector<72x64xf32>
    %30 = vector.broadcast %6 : vector<72x1xf32> to vector<72x64xf32>
    %31 = arith.addf %29, %30 : vector<72x64xf32>
    %32 = vector.extract_strided_slice %31 {offsets = [0, 0], sizes = [18, 64], strides = [1, 1]} : vector<72x64xf32> to vector<18x64xf32>
    %33 = vector.extract_strided_slice %31 {offsets = [24, 0], sizes = [18, 64], strides = [1, 1]} : vector<72x64xf32> to vector<18x64xf32>
    %cst_19 = arith.constant 0.000000e+00 : f32
    %34 = vector.broadcast %cst_19 : f32 to vector<18x64xf32>
    %35 = arith.maximumf %33, %34 : vector<18x64xf32>
    %36 = vector.extract_strided_slice %31 {offsets = [48, 0], sizes = [18, 64], strides = [1, 1]} : vector<72x64xf32> to vector<18x64xf32>
    %cst_20 = arith.constant 0.000000e+00 : f32
    %37 = vector.broadcast %cst_20 : f32 to vector<18x64xf32>
    %38 = arith.maximumf %36, %37 : vector<18x64xf32>
    %39 = arith.addf %35, %38 : vector<18x64xf32>
    %cst_21 = arith.constant 5.000000e-01 : f32
    %40 = vector.broadcast %cst_21 : f32 to vector<18x64xf32>
    %41 = arith.mulf %40, %39 : vector<18x64xf32>
    %42 = math.tanh %41 : vector<18x64xf32>
    %cst_22 = arith.constant 1.000000e+00 : f32
    %43 = vector.broadcast %cst_22 : f32 to vector<18x64xf32>
    %44 = arith.addf %42, %43 : vector<18x64xf32>
    %cst_23 = arith.constant 5.000000e-01 : f32
    %45 = vector.broadcast %cst_23 : f32 to vector<18x64xf32>
    %46 = arith.mulf %45, %44 : vector<18x64xf32>
    %47 = arith.mulf %46, %32 : vector<18x64xf32>
    %cst_24 = arith.constant dense<0.000000e+00> : vector<18x64xf32>
    %48 = tpu.matmul %11, %47, %cst_24 {dimension_numbers = #tpu.dot_dimension_numbers<[1], [0], [0], [1], [0, 0, 1, 1], [], []>} : vector<18x18xf32>, vector<18x64xf32>, vector<18x64xf32> -> vector<18x64xf32>
    %49 = vector.broadcast %7 : vector<18x1xf32> to vector<18x64xf32>
    %50 = arith.addf %48, %49 : vector<18x64xf32>
    %cst_25 = arith.constant 0.000000e+00 : f32
    %51 = vector.broadcast %cst_25 : f32 to vector<18x64xf32>
    %52 = arith.maximumf %50, %51 : vector<18x64xf32>
    %cst_26 = arith.constant 5.000000e-01 : f32
    %53 = vector.broadcast %cst_26 : f32 to vector<18x64xf32>
    %54 = arith.mulf %53, %52 : vector<18x64xf32>
    %55 = math.tanh %54 : vector<18x64xf32>
    %cst_27 = arith.constant 1.000000e+00 : f32
    %56 = vector.broadcast %cst_27 : f32 to vector<18x64xf32>
    %57 = arith.addf %55, %56 : vector<18x64xf32>
    %cst_28 = arith.constant 5.000000e-01 : f32
    %58 = vector.broadcast %cst_28 : f32 to vector<18x64xf32>
    %59 = arith.mulf %58, %57 : vector<18x64xf32>
    %60 = arith.mulf %59, %47 : vector<18x64xf32>
    %61 = arith.addf %32, %60 : vector<18x64xf32>
    %cst_29 = arith.constant dense<0.000000e+00> : vector<2x64xf32>
    %62 = tpu.matmul %12, %61, %cst_29 {dimension_numbers = #tpu.dot_dimension_numbers<[1], [0], [0], [1], [0, 0, 1, 1], [], []>} : vector<2x18xf32>, vector<18x64xf32>, vector<2x64xf32> -> vector<2x64xf32>
    %63 = vector.broadcast %8 : vector<2x1xf32> to vector<2x64xf32>
    %64 = arith.addf %62, %63 : vector<2x64xf32>
    %65 = vector.extract_strided_slice %64 {offsets = [0, 0], sizes = [1, 64], strides = [1, 1]} : vector<2x64xf32> to vector<1x64xf32>
    %66 = math.exp %65 : vector<1x64xf32>
    %67 = arith.mulf %1, %66 : vector<1x64xf32>
    %68 = vector.extract_strided_slice %64 {offsets = [1, 0], sizes = [1, 64], strides = [1, 1]} : vector<2x64xf32> to vector<1x64xf32>
    %69 = arith.addf %67, %68 : vector<1x64xf32>
    %70 = tpu.concatenate %0, %69 in 0 : vector<1x64xf32>, vector<1x64xf32> -> vector<2x64xf32>
    %c0_30 = arith.constant 0 : index
    %c0_31 = arith.constant 0 : index
    %71 = vector.load %arg4[%c0_30, %c0_31] : memref<2x64xf32, #tpu.memory_space<vmem>>, vector<2x64xf32>
    tpu.vector_store %arg4[%c0_30, %c0_31], %70 {strides = array<i32>} : memref<2x64xf32, #tpu.memory_space<vmem>>, vector<2x64xf32>,
    return
  }
  func.func @transform_0(%arg0: i32) -> (i32, i32) {
    %c0_i32 = arith.constant 0 : i32
    %c0_i32_0 = arith.constant 0 : i32
    return %c0_i32, %arg0 : i32, i32
  }
  func.func @transform_1(%arg0: i32) -> (i32, i32) {
    %c0_i32 = arith.constant 0 : i32
    %c0_i32_0 = arith.constant 0 : i32
    %c0_i32_1 = arith.constant 0 : i32
    return %c0_i32, %c0_i32_0 : i32, i32
  }
  func.func @transform_2(%arg0: i32) -> (i32, i32) {
    %c0_i32 = arith.constant 0 : i32
    %c0_i32_0 = arith.constant 0 : i32
    %c0_i32_1 = arith.constant 0 : i32
    return %c0_i32, %c0_i32_0 : i32, i32
  }
  func.func @transform_3(%arg0: i32) -> (i32, i32) {
    %c0_i32 = arith.constant 0 : i32
    %c0_i32_0 = arith.constant 0 : i32
    return %c0_i32, %arg0 : i32, i32
  }
}

</mosaic_0001>

<llo_original>
// kernel: tpu_custom_call.1
$region0: #{tpu_custom_call.1}
  #allocation0 [shape = 'u32[]', space=smem, size = 0x4, offset = 0x4, fixed_abs, tag = 'smem constant byte address 0x4 - core index']
  #allocation1 [shape = 'u32[144,128]{1,0:T(1,128)}', space=vmem, size = 0x12000, scoped, tag = 'internal scratch']
  %s0 = inlined_call_operand.vmem [shape: f32[2,64], index: 0, kind: input, shape index: {}]
  %s1 = inlined_call_operand.vmem [shape: f32[168,64], index: 1, kind: input, shape index: {}]
  %s2 = inlined_call_operand.vmem [shape: f32[72,8], index: 2, kind: input, shape index: {}]
  %s3 = inlined_call_operand.hbm [shape: f32[2,64], index: 3, kind: output, shape index: {}]
  %s4 = sld [smem:[#allocation0]]
  $region22: #{tpu_custom_call.1} parent=0
    _
  %s6 = ssub.s32 1, %s4
  %s7 = scalar_select 0, %s6, %s4
  $region1: #{tpu_custom_call.1} parent=0
    #allocation2 [shape = 'u8[1024]{0}', space=vmem, size = 0x400, scoped, tag = 'output window, operand 0, single buffered']
    #allocation3 [shape = 's32[1]{0}', space=sflag, size = 0x4, scoped, tag = 'scoped memory for tpu_custom_call.1']
    %8 = vsyncpa [#allocation3], 0
    // Predicated region
    $region2: #{tpu_custom_call.1} parent=1 // pred_check
      _
    $region3: #{tpu_custom_call.1} parent=1 // pred_check_branch
      %10 = sbr.rel (0) target = $region5
    $region4: #{tpu_custom_call.1} parent=1 // pred_region
      _
    $region5: #{tpu_custom_call.1} parent=1 // pred_fallthru
      _
    // Predicated region
    $region6: #{tpu_custom_call.1} parent=1 // pred_check
      _
    $region7: #{tpu_custom_call.1} parent=1 // pred_check_branch
      %12 = sbr.rel (0) target = $region9
    $region8: #{tpu_custom_call.1} parent=1 // pred_region
      _
    $region9: #{tpu_custom_call.1} parent=1 // pred_fallthru
      _
    // Predicated region
    $region10: #{tpu_custom_call.1} parent=1 // pred_check
      _
    $region11: #{tpu_custom_call.1} parent=1 // pred_check_branch
      %14 = sbr.rel (0) target = $region13
    $region12: #{tpu_custom_call.1} parent=1 // pred_region
      _
    $region13: #{tpu_custom_call.1} parent=1 // pred_fallthru
      _
    %v15 = vld [vmem:[%s0] sm:$0x1]
    %v16 = vld [vmem:[%s0 + $0x1] sm:$0x1]
    %v17 = vld [vmem:[%s2] sm:$0xff]
    %v18 = vld [vmem:[%s2 + $0x8] sm:$0xff]
    %v19 = vld [vmem:[%s2 + $0x10] sm:$0xff]
    %v20 = vld [vmem:[%s2 + $0x18] sm:$0xff]
    %v21 = vld [vmem:[%s2 + $0x20] sm:$0xff]
    %v22 = vld [vmem:[%s2 + $0x28] sm:$0xff]
    %v23 = vld [vmem:[%s2 + $0x30] sm:$0xff]
    %v24 = vld [vmem:[%s2 + $0x38] sm:$0xff]
    %v25 = vld [vmem:[%s2 + $0x40] sm:$0xff]
    %v26 = vld [vmem:[%s2 + $0x10] sm:$0x3]
    %v27 = vld [vmem:[%s2] sm:$0x3]
    %v28 = vld [vmem:[%s1] sm:$0xff]
    %v29 = vld [vmem:[%s1 + $0x8] sm:$0xff]
    %v30 = vld [vmem:[%s1 + $0x10] sm:$0xff]
    %v31 = vld [vmem:[%s1 + $0x18] sm:$0xff]
    %v32 = vld [vmem:[%s1 + $0x20] sm:$0xff]
    %v33 = vld [vmem:[%s1 + $0x28] sm:$0xff]
    %v34 = vld [vmem:[%s1 + $0x30] sm:$0xff]
    %v35 = vld [vmem:[%s1 + $0x38] sm:$0xff]
    %v36 = vld [vmem:[%s1 + $0x40] sm:$0xff]
    %v37 = vld [vmem:[%s1 + $0x48] sm:$0xff]
    %v38 = vld [vmem:[%s1 + $0x50] sm:$0xff]
    %v39 = vld [vmem:[%s1 + $0x58] sm:$0xff]
    %v40 = vld [vmem:[%s1 + $0x60] sm:$0xff]
    %v41 = vld [vmem:[%s1 + $0x68] sm:$0xff]
    %v42 = vld [vmem:[%s1 + $0x70] sm:$0xff]
    %v43 = vld [vmem:[%s1 + $0x78] sm:$0xff]
    %v44 = vld [vmem:[%s1 + $0x80] sm:$0xff]
    %v45 = vld [vmem:[%s1 + $0x88] sm:$0xff]
    %v46 = vld [vmem:[%s1 + $0x90] sm:$0xff]
    %v47 = vld [vmem:[%s1 + $0x98] sm:$0x3]
    %v48 = vld [vmem:[%s1 + $0xa0] sm:$0x3]
    %50 = vset.pattern.permute.xlu0 0
    %51 = vperm.xlu0 %50, %v17
    %v52 = vpop.permute.xlu0 %51
    %55 = vset.pattern.permute.xlu0 0
    %56 = vperm.xlu0 %55, %v18
    %v57 = vpop.permute.xlu0 %56
    %60 = vset.pattern.permute.xlu0 0
    %61 = vperm.xlu0 %60, %v19
    %v62 = vpop.permute.xlu0 %61
    %65 = vset.pattern.permute.xlu0 0
    %66 = vperm.xlu0 %65, %v20
    %v67 = vpop.permute.xlu0 %66
    %70 = vset.pattern.permute.xlu0 0
    %71 = vperm.xlu0 %70, %v21
    %v72 = vpop.permute.xlu0 %71
    %75 = vset.pattern.permute.xlu0 0
    %76 = vperm.xlu0 %75, %v22
    %v77 = vpop.permute.xlu0 %76
    %80 = vset.pattern.permute.xlu0 0
    %81 = vperm.xlu0 %80, %v23
    %v82 = vpop.permute.xlu0 %81
    %85 = vset.pattern.permute.xlu0 0
    %86 = vperm.xlu0 %85, %v24
    %v87 = vpop.permute.xlu0 %86
    %v89 = vlaneseq
    %v90 = vshrl.u32 %v89, 7
    %v91 = vsub.s32 0, %v90
    %v92 = vrot.slane %v15, %v91
    %v93 = vmul.f32 %v52, %v92
    %v94 = vmul.f32 %v57, %v92
    %v95 = vmul.f32 %v62, %v92
    %v96 = vmul.f32 %v67, %v92
    %v97 = vmul.f32 %v72, %v92
    %v98 = vmul.f32 %v77, %v92
    %v99 = vmul.f32 %v82, %v92
    %v100 = vmul.f32 %v87, %v92
    %101 = vset.pattern.permute.xlu0 1
    %102 = vperm.xlu0 %101, %v17
    %v103 = vpop.permute.xlu0 %102
    %105 = vset.pattern.permute.xlu0 1
    %106 = vperm.xlu0 %105, %v18
    %v107 = vpop.permute.xlu0 %106
    %109 = vset.pattern.permute.xlu0 1
    %110 = vperm.xlu0 %109, %v19
    %v111 = vpop.permute.xlu0 %110
    %113 = vset.pattern.permute.xlu0 1
    %114 = vperm.xlu0 %113, %v20
    %v115 = vpop.permute.xlu0 %114
    %117 = vset.pattern.permute.xlu0 1
    %118 = vperm.xlu0 %117, %v21
    %v119 = vpop.permute.xlu0 %118
    %121 = vset.pattern.permute.xlu0 1
    %122 = vperm.xlu0 %121, %v22
    %v123 = vpop.permute.xlu0 %122
    %125 = vset.pattern.permute.xlu0 1
    %126 = vperm.xlu0 %125, %v23
    %v127 = vpop.permute.xlu0 %126
    %129 = vset.pattern.permute.xlu0 1
    %130 = vperm.xlu0 %129, %v24
    %v131 = vpop.permute.xlu0 %130
    %v133 = vadd.f32 %v93, %v103
    %v134 = vadd.f32 %v94, %v107
    %v135 = vadd.f32 %v95, %v111
    %v136 = vadd.f32 %v96, %v115
    %v137 = vadd.f32 %v97, %v119
    %v138 = vadd.f32 %v98, %v123
    %v139 = vadd.f32 %v99, %v127
    %v140 = vadd.f32 %v100, %v131
    %v141 = vmax.f32 %v133, 0.0
    %v142 = vmax.f32 %v134, 0.0
    %v143 = vmax.f32 %v135, 0.0
    %v144 = vmax.f32 %v136, 0.0
    %v145 = vmax.f32 %v137, 0.0
    %v146 = vmax.f32 %v138, 0.0
    %v147 = vmax.f32 %v139, 0.0
    %v148 = vmax.f32 %v140, 0.0
    %149 = vset.pattern.permute.xlu0 2
    %150 = vperm.xlu0 %149, %v17
    %v151 = vpop.permute.xlu0 %150
    %153 = vset.pattern.permute.xlu0 2
    %154 = vperm.xlu0 %153, %v18
    %v155 = vpop.permute.xlu0 %154
    %157 = vset.pattern.permute.xlu0 2
    %158 = vperm.xlu0 %157, %v19
    %v159 = vpop.permute.xlu0 %158
    %161 = vset.pattern.permute.xlu0 2
    %162 = vperm.xlu0 %161, %v20
    %v163 = vpop.permute.xlu0 %162
    %165 = vset.pattern.permute.xlu0 2
    %166 = vperm.xlu0 %165, %v21
    %v167 = vpop.permute.xlu0 %166
    %169 = vset.pattern.permute.xlu0 2
    %170 = vperm.xlu0 %169, %v22
    %v171 = vpop.permute.xlu0 %170
    %173 = vset.pattern.permute.xlu0 2
    %174 = vperm.xlu0 %173, %v23
    %v175 = vpop.permute.xlu0 %174
    %177 = vset.pattern.permute.xlu0 2
    %178 = vperm.xlu0 %177, %v24
    %v179 = vpop.permute.xlu0 %178
    %v181 = vmul.f32 %v151, %v92
    %v182 = vmul.f32 %v155, %v92
    %v183 = vmul.f32 %v159, %v92
    %v184 = vmul.f32 %v163, %v92
    %v185 = vmul.f32 %v167, %v92
    %v186 = vmul.f32 %v171, %v92
    %v187 = vmul.f32 %v175, %v92
    %v188 = vmul.f32 %v179, %v92
    %vm189 = vcmask 523264
    %v191 = vsel %vm189, %v28, 0
    %v194 = vsel %vm189, %v29, 0
    %v197 = vsel %vm189, %v30, 0
    %v200 = vsel %vm189, %v31, 0
    %v203 = vsel %vm189, %v32, 0
    %v206 = vsel %vm189, %v33, 0
    %v209 = vsel %vm189, %v34, 0
    %v212 = vsel %vm189, %v35, 0
    %214 = vmatprep.subr.mxu0 0.0
    %215 = vmatpush1.msra.mxu0 %v141
    %216 = vmatprep.subr.mxu0 0.0
    %217 = vmatpush1.msra.mxu0 %v142
    %218 = vmatprep.subr.mxu0 0.0
    %219 = vmatpush1.msra.mxu0 %v143
    %220 = vmatprep.subr.mxu0 0.0
    %221 = vmatpush1.msra.mxu0 %v144
    %222 = vmatprep.subr.mxu0 0.0
    %223 = vmatpush1.msra.mxu0 %v145
    %224 = vmatprep.subr.mxu0 0.0
    %225 = vmatpush1.msra.mxu0 %v146
    %226 = vmatprep.subr.mxu0 0.0
    %227 = vmatpush1.msra.mxu0 %v147
    %228 = vmatprep.subr.mxu0 0.0
    %229 = vmatpush1.msra.mxu0 %v148
    %230 = vmatprep.subr.mxu0 0.0
    %231 = vmatpush1.msra.mxu0 0.0
    %232 = vmatprep.subr.mxu0 0.0
    %233 = vmatpush1.msra.mxu0 0.0
    %234 = vmatprep.subr.mxu0 0.0
    %235 = vmatpush1.msra.mxu0 0.0
    %236 = vmatprep.subr.mxu0 0.0
    %237 = vmatpush1.msra.mxu0 0.0
    %238 = vmatprep.subr.mxu0 0.0
    %239 = vmatpush1.msra.mxu0 0.0
    %240 = vmatprep.subr.mxu0 0.0
    %241 = vmatpush1.msra.mxu0 0.0
    %242 = vmatprep.subr.mxu0 0.0
    %243 = vmatpush1.msra.mxu0 0.0
    %244 = vmatprep.subr.mxu0 0.0
    %245 = vmatpush1.msra.mxu0 0.0
    %246 = vmatprep.subr.mxu0 0.0
    %247 = vmatpush1.msra.mxu0 0.0
    %248 = vmatprep.subr.mxu0 0.0
    %249 = vmatpush1.msra.mxu0 0.0
    %250 = vmatprep.subr.mxu0 0.0
    %251 = vmatpush1.msra.mxu0 0.0
    %252 = vmatprep.subr.mxu0 0.0
    %253 = vmatpush1.msra.mxu0 0.0
    %254 = vmatprep.subr.mxu0 0.0
    %255 = vmatpush1.msra.mxu0 0.0
    %256 = vmatprep.subr.mxu0 0.0
    %257 = vmatpush1.msra.mxu0 0.0
    %258 = vmatprep.subr.mxu0 0.0
    %259 = vmatpush1.msra.mxu0 0.0
    %260 = vmatprep.subr.mxu0 0.0
    %261 = vmatpush1.msra.mxu0 0.0
    %262 = vmatprep.subr.mxu0 0.0
    %263 = vmatpush1.msra.mxu0 0.0
    %264 = vmatprep.subr.mxu0 0.0
    %265 = vmatpush1.msra.mxu0 0.0
    %266 = vmatprep.subr.mxu0 0.0
    %267 = vmatpush1.msra.mxu0 0.0
    %268 = vmatprep.subr.mxu0 0.0
    %269 = vmatpush1.msra.mxu0 0.0
    %270 = vmatprep.subr.mxu0 0.0
    %271 = vmatpush1.msra.mxu0 0.0
    %272 = vmatprep.subr.mxu0 0.0
    %273 = vmatpush1.msra.mxu0 0.0
    %274 = vmatprep.subr.mxu0 0.0
    %275 = vmatpush1.msra.mxu0 0.0
    %276 = vmatprep.subr.mxu0 0.0
    %277 = vmatpush1.msra.mxu0 0.0
    %278 = vmatprep.mubr.f32.mxu0 0.0
    %279 = vmatmul.mubr.f32.gmra.mrb[0].mxu0 %v191
    %v280 = vpop.f32.mrb[0].mxu0
    %v281 = vadd.f32 0.0, %v280
    %v282 = vpop.f32.mrb[0].mxu0
    %283 = vmatprep.mubr.f32.mxu0 0.0
    %284 = vmatmul.mubr.f32.gmra.mrb[0].mxu0 %v194
    %v285 = vpop.f32.mrb[0].mxu0
    %v286 = vadd.f32 0.0, %v285
    %v287 = vpop.f32.mrb[0].mxu0
    %288 = vmatprep.mubr.f32.mxu0 0.0
    %289 = vmatmul.mubr.f32.gmra.mrb[0].mxu0 %v197
    %v290 = vpop.f32.mrb[0].mxu0
    %v291 = vadd.f32 0.0, %v290
    %v292 = vpop.f32.mrb[0].mxu0
    %293 = vmatprep.mubr.f32.mxu0 0.0
    %294 = vmatmul.mubr.f32.gmra.mrb[0].mxu0 %v200
    %v295 = vpop.f32.mrb[0].mxu0
    %v296 = vadd.f32 0.0, %v295
    %v297 = vpop.f32.mrb[0].mxu0
    %298 = vmatprep.mubr.f32.mxu0 0.0
    %299 = vmatmul.mubr.f32.gmra.mrb[0].mxu0 %v203
    %v300 = vpop.f32.mrb[0].mxu0
    %v301 = vadd.f32 0.0, %v300
    %v302 = vpop.f32.mrb[0].mxu0
    %303 = vmatprep.mubr.f32.mxu0 0.0
    %304 = vmatmul.mubr.f32.gmra.mrb[0].mxu0 %v206
    %v305 = vpop.f32.mrb[0].mxu0
    %v306 = vadd.f32 0.0, %v305
    %v307 = vpop.f32.mrb[0].mxu0
    %308 = vmatprep.mubr.f32.mxu0 0.0
    %309 = vmatmul.mubr.f32.gmra.mrb[0].mxu0 %v209
    %v310 = vpop.f32.mrb[0].mxu0
    %v311 = vadd.f32 0.0, %v310
    %v312 = vpop.f32.mrb[0].mxu0
    %313 = vmatprep.mubr.f32.mxu0 0.0
    %314 = vmatmul.mubr.f32.gmra.mrb[0].mxu0 %v212
    %v315 = vpop.f32.mrb[0].mxu0
    %v316 = vadd.f32 0.0, %v315
    %v317 = vpop.f32.mrb[0].mxu0
    %318 = vdwg.mxu0
    %v319 = vadd.f32 %v181, %v281
    %v320 = vadd.f32 %v182, %v286
    %v321 = vadd.f32 %v183, %v291
    %v322 = vadd.f32 %v184, %v296
    %v323 = vadd.f32 %v185, %v301
    %v324 = vadd.f32 %v186, %v306
    %v325 = vadd.f32 %v187, %v311
    %v326 = vadd.f32 %v188, %v316
    %327 = vset.pattern.permute.xlu0 3
    %328 = vperm.xlu0 %327, %v17
    %v329 = vpop.permute.xlu0 %328
    %331 = vset.pattern.permute.xlu0 3
    %332 = vperm.xlu0 %331, %v18
    %v333 = vpop.permute.xlu0 %332
    %335 = vset.pattern.permute.xlu0 3
    %336 = vperm.xlu0 %335, %v19
    %v337 = vpop.permute.xlu0 %336
    %339 = vset.pattern.permute.xlu0 3
    %340 = vperm.xlu0 %339, %v20
    %v341 = vpop.permute.xlu0 %340
    %343 = vset.pattern.permute.xlu0 3
    %344 = vperm.xlu0 %343, %v21
    %v345 = vpop.permute.xlu0 %344
    %347 = vset.pattern.permute.xlu0 3
    %348 = vperm.xlu0 %347, %v22
    %v349 = vpop.permute.xlu0 %348
    %351 = vset.pattern.permute.xlu0 3
    %352 = vperm.xlu0 %351, %v23
    %v353 = vpop.permute.xlu0 %352
    %355 = vset.pattern.permute.xlu0 3
    %356 = vperm.xlu0 %355, %v24
    %v357 = vpop.permute.xlu0 %356
    %v359 = vadd.f32 %v319, %v329
    %v360 = vadd.f32 %v320, %v333
    %v361 = vadd.f32 %v321, %v337
    %v362 = vadd.f32 %v322, %v341
    %v363 = vadd.f32 %v323, %v345
    %v364 = vadd.f32 %v324, %v349
    %v365 = vadd.f32 %v325, %v353
    %v366 = vadd.f32 %v326, %v357
    %v367 = vmax.f32 %v359, 0.0
    %v368 = vmax.f32 %v360, 0.0
    %v369 = vmax.f32 %v361, 0.0
    %v370 = vmax.f32 %v362, 0.0
    %v371 = vmax.f32 %v363, 0.0
    %v372 = vmax.f32 %v364, 0.0
    %v373 = vmax.f32 %v365, 0.0
    %v374 = vmax.f32 %v366, 0.0
    %375 = vset.pattern.permute.xlu0 4
    %376 = vperm.xlu0 %375, %v17
    %v377 = vpop.permute.xlu0 %376
    %379 = vset.pattern.permute.xlu0 4
    %380 = vperm.xlu0 %379, %v18
    %v381 = vpop.permute.xlu0 %380
    %383 = vset.pattern.permute.xlu0 4
    %384 = vperm.xlu0 %383, %v19
    %v385 = vpop.permute.xlu0 %384
    %387 = vset.pattern.permute.xlu0 4
    %388 = vperm.xlu0 %387, %v20
    %v389 = vpop.permute.xlu0 %388
    %391 = vset.pattern.permute.xlu0 4
    %392 = vperm.xlu0 %391, %v21
    %v393 = vpop.permute.xlu0 %392
    %395 = vset.pattern.permute.xlu0 4
    %396 = vperm.xlu0 %395, %v22
    %v397 = vpop.permute.xlu0 %396
    %399 = vset.pattern.permute.xlu0 4
    %400 = vperm.xlu0 %399, %v23
    %v401 = vpop.permute.xlu0 %400
    %403 = vset.pattern.permute.xlu0 4
    %404 = vperm.xlu0 %403, %v24
    %v405 = vpop.permute.xlu0 %404
    %408 = vset.pattern.permute.xlu0 4
    %409 = vperm.xlu0 %408, %v25
    %v410 = vpop.permute.xlu0 %409
    %v413 = vsel %vm189, %v36, 0
    %v416 = vsel %vm189, %v37, 0
    %v419 = vsel %vm189, %v38, 0
    %v422 = vsel %vm189, %v39, 0
    %v425 = vsel %vm189, %v40, 0
    %v428 = vsel %vm189, %v41, 0
    %v431 = vsel %vm189, %v42, 0
    %v434 = vsel %vm189, %v43, 0
    %v437 = vsel %vm189, %v44, 0
    %439 = vmatprep.subr.mxu0 0.0
    %440 = vmatpush1.msra.mxu0 %v367
    %441 = vmatprep.subr.mxu0 0.0
    %442 = vmatpush1.msra.mxu0 %v368
    %443 = vmatprep.subr.mxu0 0.0
    %444 = vmatpush1.msra.mxu0 %v369
    %445 = vmatprep.subr.mxu0 0.0
    %446 = vmatpush1.msra.mxu0 %v370
    %447 = vmatprep.subr.mxu0 0.0
    %448 = vmatpush1.msra.mxu0 %v371
    %449 = vmatprep.subr.mxu0 0.0
    %450 = vmatpush1.msra.mxu0 %v372
    %451 = vmatprep.subr.mxu0 0.0
    %452 = vmatpush1.msra.mxu0 %v373
    %453 = vmatprep.subr.mxu0 0.0
    %454 = vmatpush1.msra.mxu0 %v374
    %455 = vmatprep.subr.mxu0 0.0
    %456 = vmatpush1.msra.mxu0 0.0
    %457 = vmatprep.subr.mxu0 0.0
    %458 = vmatpush1.msra.mxu0 0.0
    %459 = vmatprep.subr.mxu0 0.0
    %460 = vmatpush1.msra.mxu0 0.0
    %461 = vmatprep.subr.mxu0 0.0
    %462 = vmatpush1.msra.mxu0 0.0
    %463 = vmatprep.subr.mxu0 0.0
    %464 = vmatpush1.msra.mxu0 0.0
    %465 = vmatprep.subr.mxu0 0.0
    %466 = vmatpush1.msra.mxu0 0.0
    %467 = vmatprep.subr.mxu0 0.0
    %468 = vmatpush1.msra.mxu0 0.0
    %469 = vmatprep.subr.mxu0 0.0
    %470 = vmatpush1.msra.mxu0 0.0
    %471 = vmatprep.subr.mxu0 0.0
    %472 = vmatpush1.msra.mxu0 0.0
    %473 = vmatprep.subr.mxu0 0.0
    %474 = vmatpush1.msra.mxu0 0.0
    %475 = vmatprep.subr.mxu0 0.0
    %476 = vmatpush1.msra.mxu0 0.0
    %477 = vmatprep.subr.mxu0 0.0
    %478 = vmatpush1.msra.mxu0 0.0
    %479 = vmatprep.subr.mxu0 0.0
    %480 = vmatpush1.msra.mxu0 0.0
    %481 = vmatprep.subr.mxu0 0.0
    %482 = vmatpush1.msra.mxu0 0.0
    %483 = vmatprep.subr.mxu0 0.0
    %484 = vmatpush1.msra.mxu0 0.0
    %485 = vmatprep.subr.mxu0 0.0
    %486 = vmatpush1.msra.mxu0 0.0
    %487 = vmatprep.subr.mxu0 0.0
    %488 = vmatpush1.msra.mxu0 0.0
    %489 = vmatprep.subr.mxu0 0.0
    %490 = vmatpush1.msra.mxu0 0.0
    %491 = vmatprep.subr.mxu0 0.0
    %492 = vmatpush1.msra.mxu0 0.0
    %493 = vmatprep.subr.mxu0 0.0
    %494 = vmatpush1.msra.mxu0 0.0
    %495 = vmatprep.subr.mxu0 0.0
    %496 = vmatpush1.msra.mxu0 0.0
    %497 = vmatprep.subr.mxu0 0.0
    %498 = vmatpush1.msra.mxu0 0.0
    %499 = vmatprep.subr.mxu0 0.0
    %500 = vmatpush1.msra.mxu0 0.0
    %501 = vmatprep.subr.mxu0 0.0
    %502 = vmatpush1.msra.mxu0 0.0
    %503 = vmatprep.mubr.f32.mxu0 0.0
    %504 = vmatmul.mubr.f32.gmra.mrb[0].mxu0 %v413
    %v505 = vpop.f32.mrb[0].mxu0
    %v506 = vadd.f32 %v377, %v505
    %v507 = vpop.f32.mrb[0].mxu0
    %508 = vmatprep.mubr.f32.mxu0 0.0
    %509 = vmatmul.mubr.f32.gmra.mrb[0].mxu0 %v416
    %v510 = vpop.f32.mrb[0].mxu0
    %v511 = vadd.f32 %v381, %v510
    %v512 = vpop.f32.mrb[0].mxu0
    %513 = vmatprep.mubr.f32.mxu0 0.0
    %514 = vmatmul.mubr.f32.gmra.mrb[0].mxu0 %v419
    %v515 = vpop.f32.mrb[0].mxu0
    %v516 = vadd.f32 %v385, %v515
    %v517 = vpop.f32.mrb[0].mxu0
    %518 = vmatprep.mubr.f32.mxu0 0.0
    %519 = vmatmul.mubr.f32.gmra.mrb[0].mxu0 %v422
    %v520 = vpop.f32.mrb[0].mxu0
    %v521 = vadd.f32 %v389, %v520
    %v522 = vpop.f32.mrb[0].mxu0
    %523 = vmatprep.mubr.f32.mxu0 0.0
    %524 = vmatmul.mubr.f32.gmra.mrb[0].mxu0 %v425
    %v525 = vpop.f32.mrb[0].mxu0
    %v526 = vadd.f32 %v393, %v525
    %v527 = vpop.f32.mrb[0].mxu0
    %528 = vmatprep.mubr.f32.mxu0 0.0
    %529 = vmatmul.mubr.f32.gmra.mrb[0].mxu0 %v428
    %v530 = vpop.f32.mrb[0].mxu0
    %v531 = vadd.f32 %v397, %v530
    %v532 = vpop.f32.mrb[0].mxu0
    %533 = vmatprep.mubr.f32.mxu0 0.0
    %534 = vmatmul.mubr.f32.gmra.mrb[0].mxu0 %v431
    %v535 = vpop.f32.mrb[0].mxu0
    %v536 = vadd.f32 %v401, %v535
    %v537 = vpop.f32.mrb[0].mxu0
    %538 = vmatprep.mubr.f32.mxu0 0.0
    %539 = vmatmul.mubr.f32.gmra.mrb[0].mxu0 %v434
    %v540 = vpop.f32.mrb[0].mxu0
    %v541 = vadd.f32 %v405, %v540
    %v542 = vpop.f32.mrb[0].mxu0
    %543 = vmatprep.mubr.f32.mxu0 0.0
    %544 = vmatmul.mubr.f32.gmra.mrb[0].mxu0 %v437
    %v545 = vpop.f32.mrb[0].mxu0
    %v546 = vadd.f32 %v410, %v545
    %v547 = vpop.f32.mrb[0].mxu0
    %548 = vdwg.mxu0
    %v549 = vmax.f32 %v521, 0.0
    %v550 = vmax.f32 %v526, 0.0
    %v551 = vmax.f32 %v531, 0.0
    %v552 = vmax.f32 %v536, 0.0
    %v553 = vmax.f32 %v541, 0.0
    %v554 = vmax.f32 %v546, 0.0
    %v555 = vadd.f32 %v549, %v552
    %v556 = vadd.f32 %v550, %v553
    %v557 = vadd.f32 %v551, %v554
    %v558 = vmul.f32 %v555, 0.5
    %v559 = vmul.f32 %v556, 0.5
    %v560 = vmul.f32 %v557, 0.5
    %v561 = vtanh.pop %v558
    %v562 = vtanh.pop %v559
    %v563 = vtanh.pop %v560
    %v564 = vadd.f32 %v561, 1.0
    %v565 = vadd.f32 %v562, 1.0
    %v566 = vadd.f32 %v563, 1.0
    %v567 = vmul.f32 %v564, 0.5
    %v568 = vmul.f32 %v565, 0.5
    %v569 = vmul.f32 %v566, 0.5
    %v570 = vmul.f32 %v567, %v506
    %v571 = vmul.f32 %v568, %v511
    %v572 = vmul.f32 %v569, %v516
    %573 = vset.pattern.permute.xlu0 5
    %574 = vperm.xlu0 %573, %v17
    %v575 = vpop.permute.xlu0 %574
    %577 = vset.pattern.permute.xlu0 5
    %578 = vperm.xlu0 %577, %v18
    %v579 = vpop.permute.xlu0 %578
    %582 = vset.pattern.permute.xlu0 5
    %583 = vperm.xlu0 %582, %v26
    %v584 = vpop.permute.xlu0 %583
    %vm586 = vcmask 146432
    %v588 = vsel %vm586, %v45, 0
    %v591 = vsel %vm586, %v46, 0
    %v594 = vsel %vm586, %v47, 0
    %vm596 = vcmask 1041408
    %v598 = vsel %vm596, %v572, 0
    %600 = vmatprep.subr.mxu0 0.0
    %601 = vmatpush1.msra.mxu0 %v570
    %602 = vmatprep.subr.mxu0 0.0
    %603 = vmatpush1.msra.mxu0 %v571
    %604 = vmatprep.subr.mxu0 0.0
    %605 = vmatpush1.msra.mxu0 %v598
    %606 = vmatprep.subr.mxu0 0.0
    %607 = vmatpush1.msra.mxu0 0.0
    %608 = vmatprep.subr.mxu0 0.0
    %609 = vmatpush1.msra.mxu0 0.0
    %610 = vmatprep.subr.mxu0 0.0
    %611 = vmatpush1.msra.mxu0 0.0
    %612 = vmatprep.subr.mxu0 0.0
    %613 = vmatpush1.msra.mxu0 0.0
    %614 = vmatprep.subr.mxu0 0.0
    %615 = vmatpush1.msra.mxu0 0.0
    %616 = vmatprep.subr.mxu0 0.0
    %617 = vmatpush1.msra.mxu0 0.0
    %618 = vmatprep.subr.mxu0 0.0
    %619 = vmatpush1.msra.mxu0 0.0
    %620 = vmatprep.subr.mxu0 0.0
    %621 = vmatpush1.msra.mxu0 0.0
    %622 = vmatprep.subr.mxu0 0.0
    %623 = vmatpush1.msra.mxu0 0.0
    %624 = vmatprep.subr.mxu0 0.0
    %625 = vmatpush1.msra.mxu0 0.0
    %626 = vmatprep.subr.mxu0 0.0
    %627 = vmatpush1.msra.mxu0 0.0
    %628 = vmatprep.subr.mxu0 0.0
    %629 = vmatpush1.msra.mxu0 0.0
    %630 = vmatprep.subr.mxu0 0.0
    %631 = vmatpush1.msra.mxu0 0.0
    %632 = vmatprep.subr.mxu0 0.0
    %633 = vmatpush1.msra.mxu0 0.0
    %634 = vmatprep.subr.mxu0 0.0
    %635 = vmatpush1.msra.mxu0 0.0
    %636 = vmatprep.subr.mxu0 0.0
    %637 = vmatpush1.msra.mxu0 0.0
    %638 = vmatprep.subr.mxu0 0.0
    %639 = vmatpush1.msra.mxu0 0.0
    %640 = vmatprep.subr.mxu0 0.0
    %641 = vmatpush1.msra.mxu0 0.0
    %642 = vmatprep.subr.mxu0 0.0
    %643 = vmatpush1.msra.mxu0 0.0
    %644 = vmatprep.subr.mxu0 0.0
    %645 = vmatpush1.msra.mxu0 0.0
    %646 = vmatprep.subr.mxu0 0.0
    %647 = vmatpush1.msra.mxu0 0.0
    %648 = vmatprep.subr.mxu0 0.0
    %649 = vmatpush1.msra.mxu0 0.0
    %650 = vmatprep.subr.mxu0 0.0
    %651 = vmatpush1.msra.mxu0 0.0
    %652 = vmatprep.subr.mxu0 0.0
    %653 = vmatpush1.msra.mxu0 0.0
    %654 = vmatprep.subr.mxu0 0.0
    %655 = vmatpush1.msra.mxu0 0.0
    %656 = vmatprep.subr.mxu0 0.0
    %657 = vmatpush1.msra.mxu0 0.0
    %658 = vmatprep.subr.mxu0 0.0
    %659 = vmatpush1.msra.mxu0 0.0
    %660 = vmatprep.subr.mxu0 0.0
    %661 = vmatpush1.msra.mxu0 0.0
    %662 = vmatprep.subr.mxu0 0.0
    %663 = vmatpush1.msra.mxu0 0.0
    %664 = vmatprep.mubr.f32.mxu0 0.0
    %665 = vmatmul.mubr.f32.gmra.mrb[0].mxu0 %v588
    %v666 = vpop.f32.mrb[0].mxu0
    %v667 = vadd.f32 %v575, %v666
    %v668 = vpop.f32.mrb[0].mxu0
    %669 = vmatprep.mubr.f32.mxu0 0.0
    %670 = vmatmul.mubr.f32.gmra.mrb[0].mxu0 %v591
    %v671 = vpop.f32.mrb[0].mxu0
    %v672 = vadd.f32 %v579, %v671
    %v673 = vpop.f32.mrb[0].mxu0
    %674 = vmatprep.mubr.f32.mxu0 0.0
    %675 = vmatmul.mubr.f32.gmra.mrb[0].mxu0 %v594
    %v676 = vpop.f32.mrb[0].mxu0
    %v677 = vadd.f32 %v584, %v676
    %v678 = vpop.f32.mrb[0].mxu0
    %679 = vdwg.mxu0
    %v680 = vmax.f32 %v667, 0.0
    %v681 = vmax.f32 %v672, 0.0
    %v682 = vmax.f32 %v677, 0.0
    %v683 = vmul.f32 %v680, 0.5
    %v684 = vmul.f32 %v681, 0.5
    %v685 = vmul.f32 %v682, 0.5
    %v686 = vtanh.pop %v683
    %v687 = vtanh.pop %v684
    %v688 = vtanh.pop %v685
    %v689 = vadd.f32 %v686, 1.0
    %v690 = vadd.f32 %v687, 1.0
    %v691 = vadd.f32 %v688, 1.0
    %v692 = vmul.f32 %v689, 0.5
    %v693 = vmul.f32 %v690, 0.5
    %v694 = vmul.f32 %v691, 0.5
    %v695 = vmul.f32 %v692, %v570
    %v696 = vmul.f32 %v693, %v571
    %v697 = vmul.f32 %v694, %v572
    %v698 = vadd.f32 %v506, %v695
    %v699 = vadd.f32 %v511, %v696
    %v700 = vadd.f32 %v516, %v697
    %702 = vset.pattern.permute.xlu0 6
    %703 = vperm.xlu0 %702, %v27
    %v704 = vpop.permute.xlu0 %703
    %v707 = vsel %vm586, %v48, 0
    %v710 = vsel %vm596, %v700, 0
    %712 = vmatprep.subr.mxu0 0.0
    %713 = vmatpush1.msra.mxu0 %v698
    %714 = vmatprep.subr.mxu0 0.0
    %715 = vmatpush1.msra.mxu0 %v699
    %716 = vmatprep.subr.mxu0 0.0
    %717 = vmatpush1.msra.mxu0 %v710
    %718 = vmatprep.subr.mxu0 0.0
    %719 = vmatpush1.msra.mxu0 0.0
    %720 = vmatprep.subr.mxu0 0.0
    %721 = vmatpush1.msra.mxu0 0.0
    %722 = vmatprep.subr.mxu0 0.0
    %723 = vmatpush1.msra.mxu0 0.0
    %724 = vmatprep.subr.mxu0 0.0
    %725 = vmatpush1.msra.mxu0 0.0
    %726 = vmatprep.subr.mxu0 0.0
    %727 = vmatpush1.msra.mxu0 0.0
    %728 = vmatprep.subr.mxu0 0.0
    %729 = vmatpush1.msra.mxu0 0.0
    %730 = vmatprep.subr.mxu0 0.0
    %731 = vmatpush1.msra.mxu0 0.0
    %732 = vmatprep.subr.mxu0 0.0
    %733 = vmatpush1.msra.mxu0 0.0
    %734 = vmatprep.subr.mxu0 0.0
    %735 = vmatpush1.msra.mxu0 0.0
    %736 = vmatprep.subr.mxu0 0.0
    %737 = vmatpush1.msra.mxu0 0.0
    %738 = vmatprep.subr.mxu0 0.0
    %739 = vmatpush1.msra.mxu0 0.0
    %740 = vmatprep.subr.mxu0 0.0
    %741 = vmatpush1.msra.mxu0 0.0
    %742 = vmatprep.subr.mxu0 0.0
    %743 = vmatpush1.msra.mxu0 0.0
    %744 = vmatprep.subr.mxu0 0.0
    %745 = vmatpush1.msra.mxu0 0.0
    %746 = vmatprep.subr.mxu0 0.0
    %747 = vmatpush1.msra.mxu0 0.0
    %748 = vmatprep.subr.mxu0 0.0
    %749 = vmatpush1.msra.mxu0 0.0
    %750 = vmatprep.subr.mxu0 0.0
    %751 = vmatpush1.msra.mxu0 0.0
    %752 = vmatprep.subr.mxu0 0.0
    %753 = vmatpush1.msra.mxu0 0.0
    %754 = vmatprep.subr.mxu0 0.0
    %755 = vmatpush1.msra.mxu0 0.0
    %756 = vmatprep.subr.mxu0 0.0
    %757 = vmatpush1.msra.mxu0 0.0
    %758 = vmatprep.subr.mxu0 0.0
    %759 = vmatpush1.msra.mxu0 0.0
    %760 = vmatprep.subr.mxu0 0.0
    %761 = vmatpush1.msra.mxu0 0.0
    %762 = vmatprep.subr.mxu0 0.0
    %763 = vmatpush1.msra.mxu0 0.0
    %764 = vmatprep.subr.mxu0 0.0
    %765 = vmatpush1.msra.mxu0 0.0
    %766 = vmatprep.subr.mxu0 0.0
    %767 = vmatpush1.msra.mxu0 0.0
    %768 = vmatprep.subr.mxu0 0.0
    %769 = vmatpush1.msra.mxu0 0.0
    %770 = vmatprep.subr.mxu0 0.0
    %771 = vmatpush1.msra.mxu0 0.0
    %772 = vmatprep.subr.mxu0 0.0
    %773 = vmatpush1.msra.mxu0 0.0
    %774 = vmatprep.subr.mxu0 0.0
    %775 = vmatpush1.msra.mxu0 0.0
    %776 = vmatprep.mubr.f32.mxu0 0.0
    %777 = vmatmul.mubr.f32.gmra.mrb[0].mxu0 %v707
    %v778 = vpop.f32.mrb[0].mxu0
    %v779 = vadd.f32 %v704, %v778
    %v780 = vpop.f32.mrb[0].mxu0
    %781 = vdwg.mxu0
    %v782 = vmul.f32 %v779, 1.442695
    %v783 = vpow.pop %v782
    %v784 = vmul.f32 %v16, %v783
    %v786 = vrot.slane %v779, 1
    %v788 = vadd.f32 %v784, %v786
    %v790 = vrot.slane %v788, 7
    %vm792 = vcmask 1040384
    %v793 = vsel %vm792, %v15, %v790
    %vm794 = vcmask 517120
    %795 = vst.msk [vmem:[#allocation2] sm:$0x3] %vm794, %v793
    // Predicated region
    $region14: #{tpu_custom_call.1} parent=1 // pred_check
      _
    $region15: #{tpu_custom_call.1} parent=1 // pred_check_branch
      %797 = sbr.rel (0) target = $region17
    $region16: #{tpu_custom_call.1} parent=1 // pred_region
      %s799 = ssub.s32 32, 32
      %800 = vsyncadd [#allocation3], %s799
      %s802 = sshll.u32 [#allocation2], 4
      %s803 = int_to_ptr.vmem [resolvable:$true] %s802
      %805 = dma.vmem_to_hbm [thread:$0]  %s803, 32, %s3, [#allocation3]
    $region17: #{tpu_custom_call.1} parent=1 // pred_fallthru
      _
    // Predicated region
    $region18: #{tpu_custom_call.1} parent=1 // pred_check
      _
    $region19: #{tpu_custom_call.1} parent=1 // pred_check_branch
      %807 = sbr.rel (0) target = $region21
    $region20: #{tpu_custom_call.1} parent=1 // pred_region
      %808 = dma.done [#allocation3], 32
    $region21: #{tpu_custom_call.1} parent=1 // pred_fallthru
      _
    %809 = vsyncpa [#allocation3], 1

</llo_original>
